<compile_context>
chip_gen: v5e
topology: v5e:2x2
jax: 0.10.0
libtpu: 0.0.40
codegen_flags: <defaults>
</compile_context>

<pallas_src>
import math
from typing import NamedTuple, Optional, Union

import jax
import jax.numpy as jnp
from jax.experimental import pallas as pl
from jax.experimental.pallas import tpu as pltpu

_LANE = 128          # lane width (last dim)
_SUBLANE = 8         # sublane width (second-to-last dim)
_VOCAB_CHUNK = 2048  # K-dim chunk for the one-hot matmul path
_GATHER_ROWS = 8     # rows gathered per grid step in the DMA-gather path


def _round_up(x: int, m: int) -> int:
    return ((x + m - 1) // m) * m


def _vmem_budget_bytes() -> int:
    """Per-core VMEM capacity with headroom (conservative fallback if unknown)."""
    try:
        cap = int(pltpu.get_tpu_info().vmem_capacity_bytes)
    except Exception:
        cap = 64 * 1024 * 1024  # v7x per-TC VMEM: the smallest current gen
    return (cap * 3) // 4


class PreparedEmbedding(NamedTuple):
    table: jax.Array      # (vocab_pad, emb_pad) zero-padded weight
    vocab_size: int
    emb_size: int


def prepare_token_embedding(weight: jax.Array) -> PreparedEmbedding:
    """Pad the embedding weight once at init time (hoisted out of the hot path).

    vocab is padded to a sublane multiple (and to a _VOCAB_CHUNK multiple when
    the matmul path would need chunking); emb is padded to a lane multiple so
    output stores are unmasked `vst`s.  Padding rows are zero and unreachable
    (ids are clamped), padded output columns are sliced away.
    """
    vocab_size, emb_size = weight.shape
    emb_pad = _round_up(emb_size, _LANE)
    if vocab_size <= _VOCAB_CHUNK:
        vocab_pad = _round_up(vocab_size, _SUBLANE)
    else:
        vocab_pad = _round_up(vocab_size, _VOCAB_CHUNK)
    table = jnp.pad(weight, ((0, vocab_pad - vocab_size), (0, emb_pad - emb_size)))
    return PreparedEmbedding(table=table, vocab_size=vocab_size, emb_size=emb_size)


# ----------------------------------------------------------------------------
# Path 1: resident-table one-hot matmul (small vocab)
# ----------------------------------------------------------------------------
def _make_matmul_kernel(scale: float, tile_t: int, vocab_pad: int,
                        emb_pad: int, chunk: int):
    n_chunks = vocab_pad // chunk

    def kernel(ids_ref, table_hbm, out_ref, table_vmem):
        # ids_ref:    VMEM (tile_t, 1) int32 token ids for this tile
        # table_hbm:  HBM  (vocab_pad, emb_pad)  (memory_space=pl.ANY)
        # out_ref:    VMEM (tile_t, emb_pad)
        # table_vmem: VMEM scratch (vocab_pad, emb_pad) -- resident table
        #
        # Copy the table to VMEM exactly once; scratch persists across grid
        # steps so this is an explicit SINGLE buffer (BlockSpec residency would
        # double-buffer it).  Grid axis is "arbitrary" (sequential), so step 0
        # is guaranteed to run first on the core that runs the rest.
        @pl.when(pl.program_id(0) == 0)
        def _():
            pltpu.sync_copy(table_hbm, table_vmem)

        ids = ids_ref[...]  # (tile_t, 1)

        if n_chunks == 1:
            col = jax.lax.broadcasted_iota(jnp.int32, (tile_t, vocab_pad), 1)
            onehot = (col == ids).astype(jnp.float32)
            acc = jnp.dot(onehot, table_vmem[...].astype(jnp.float32),
                          preferred_element_type=jnp.float32,
                          precision=jax.lax.Precision.HIGHEST)
        else:
            # Chunk the vocab (K) axis so the one-hot intermediate is bounded
            # by tile_t * chunk * 4 bytes instead of tile_t * vocab_pad * 4.
            def body(c, acc):
                start = pl.multiple_of(c * chunk, chunk)
                col = jax.lax.broadcasted_iota(jnp.int32, (tile_t, chunk), 1) + start
                onehot = (col == ids).astype(jnp.float32)
                tab = table_vmem[pl.ds(start, chunk), :].astype(jnp.float32)
                return acc + jnp.dot(onehot, tab,
                                     preferred_element_type=jnp.float32,
                                     precision=jax.lax.Precision.HIGHEST)

            acc = jax.lax.fori_loop(0, n_chunks, body,
                                    jnp.zeros((tile_t, emb_pad), jnp.float32))

        out_ref[...] = (acc * jnp.float32(scale)).astype(out_ref.dtype)

    return kernel


def _matmul_vmem_bytes(prep: PreparedEmbedding, tile_t: int) -> int:
    vocab_pad, emb_pad = prep.table.shape
    itemsize = prep.table.dtype.itemsize
    chunk = min(vocab_pad, _VOCAB_CHUNK)
    return (vocab_pad * emb_pad * itemsize          # resident table (1 buffer)
            + 2 * tile_t * _LANE * 4                # ids blocks (lane-padded), x2 buffers
            + 2 * tile_t * emb_pad * itemsize       # out blocks, x2 buffers
            + tile_t * chunk * 4                    # one-hot chunk
            + tile_t * emb_pad * 4)                 # f32 accumulator


def _matmul_path(ids_flat: jax.Array, prep: PreparedEmbedding,
                 tile_t: int, vmem_limit: int) -> jax.Array:
    table = prep.table
    vocab_pad, emb_pad = table.shape
    chunk = min(vocab_pad, _VOCAB_CHUNK)
    scale = math.sqrt(prep.emb_size)

    n_tok = ids_flat.shape[0]
    n_pad = _round_up(n_tok, tile_t)
    ids = jnp.pad(ids_flat, (0, n_pad - n_tok)).reshape(n_pad, 1)

    out = pl.pallas_call(
        _make_matmul_kernel(scale, tile_t, vocab_pad, emb_pad, chunk),
        out_shape=jax.ShapeDtypeStruct((n_pad, emb_pad), table.dtype),
        grid=(n_pad // tile_t,),
        in_specs=[
            pl.BlockSpec((tile_t, 1), lambda i: (i, 0)),
            pl.BlockSpec(memory_space=pl.ANY),   # table stays in HBM; copied once
        ],
        out_specs=pl.BlockSpec((tile_t, emb_pad), lambda i: (i, 0)),
        scratch_shapes=[pltpu.VMEM((vocab_pad, emb_pad), table.dtype)],
        compiler_params=pltpu.CompilerParams(
            # "arbitrary": the step-0 table load must run on the same core as
            # every other step (also avoids per-core table duplication on v7x).
            dimension_semantics=("arbitrary",),
            vmem_limit_bytes=int(vmem_limit)),
    )(ids, table)
    return out[:n_tok, :prep.emb_size]


# ----------------------------------------------------------------------------
# Path 2: DMA row gather (large vocab / few tokens)
# ----------------------------------------------------------------------------
def _make_gather_kernel(scale: float, tile_r: int):
    def kernel(ids_ref, table_hbm, out_ref, buf, sem):
        # ids_ref:   SMEM (n_tok_pad,) int32 (scalar-prefetched)
        # table_hbm: HBM  (vocab_pad, emb_pad) (memory_space=pl.ANY)
        # out_ref:   VMEM (tile_r, emb_pad)
        # buf:       VMEM (2, tile_r, emb_pad) double buffer of gathered rows
        # sem:       DMA semaphores (2, tile_r)
        i = pl.program_id(0)
        n = pl.num_programs(0)

        def fetch(step, slot):
            for r in range(tile_r):                       # static unroll
                row = ids_ref[step * tile_r + r]
                pltpu.make_async_copy(table_hbm.at[row], buf.at[slot, r],
                                      sem.at[slot, r]).start()

        @pl.when(i == 0)
        def _():
            fetch(0, 0)                                   # prime slot 0

        slot = i % 2

        # Prefetch the NEXT tile's rows into the other slot before blocking on
        # this tile, overlapping the HBM gather with compute + output stores.
        @pl.when(i + 1 < n)
        def _():
            fetch(i + 1, 1 - slot)

        for r in range(tile_r):
            pltpu.make_async_copy(table_hbm.at[0], buf.at[slot, r],
                                  sem.at[slot, r]).wait()

        out_ref[...] = (buf[slot] * jnp.float32(scale)).astype(out_ref.dtype)

    return kernel


def _gather_path(ids_flat: jax.Array, prep: PreparedEmbedding,
                 tile_r: int, vmem_limit: int) -> jax.Array:
    table = prep.table
    vocab_pad, emb_pad = table.shape
    scale = math.sqrt(prep.emb_size)

    n_tok = ids_flat.shape[0]
    n_pad = _round_up(n_tok, tile_r)
    ids = jnp.pad(ids_flat, (0, n_pad - n_tok))           # pad with row 0 (valid)

    grid_spec = pltpu.PrefetchScalarGridSpec(
        num_scalar_prefetch=1,
        grid=(n_pad // tile_r,),
        in_specs=[pl.BlockSpec(memory_space=pl.ANY)],      # table stays in HBM
        out_specs=pl.BlockSpec((tile_r, emb_pad), lambda i, ids_ref: (i, 0)),
        scratch_shapes=[
            pltpu.VMEM((2, tile_r, emb_pad), table.dtype),
            pltpu.SemaphoreType.DMA((2, tile_r)),
        ],
    )
    out = pl.pallas_call(
        _make_gather_kernel(scale, tile_r),
        out_shape=jax.ShapeDtypeStruct((n_pad, emb_pad), table.dtype),
        grid_spec=grid_spec,
        compiler_params=pltpu.CompilerParams(
            dimension_semantics=("arbitrary",),            # cross-step double buffer
            vmem_limit_bytes=int(vmem_limit)),
    )(ids, table)
    return out[:n_tok, :prep.emb_size]


# ----------------------------------------------------------------------------
# Dispatcher (TokenEmbedding.forward equivalent)
# ----------------------------------------------------------------------------
def token_embedding(tokens: jax.Array,
                    prepared: Union[PreparedEmbedding, jax.Array],
                    *, tile_tokens: int = 256,
                    gather_rows: int = _GATHER_ROWS,
                    path: Optional[str] = None) -> jax.Array:
    """embedding(tokens) * sqrt(emb_size). `prepared` should come from
    prepare_token_embedding() (pad once at init); a raw weight also works but
    repays the padding cost on every call."""
    if not isinstance(prepared, PreparedEmbedding):
        prepared = prepare_token_embedding(prepared)

    vocab, emb = prepared.vocab_size, prepared.emb_size
    vocab_pad, emb_pad = prepared.table.shape
    itemsize = prepared.table.dtype.itemsize

    # Clamp so padding / OOB ids can never address a bad row (no-op for valid
    # PyTorch-embedding inputs).
    tok_flat = jnp.clip(tokens.reshape(-1).astype(jnp.int32), 0, vocab - 1)
    n_tok = tok_flat.shape[0]

    tile_t = _round_up(min(tile_tokens, _round_up(max(n_tok, 1), _SUBLANE)), _SUBLANE)
    tile_r = _round_up(min(gather_rows, _round_up(max(n_tok, 1), _SUBLANE)), _SUBLANE)

    budget = _vmem_budget_bytes()
    matmul_limit = _matmul_vmem_bytes(prepared, tile_t) + (8 << 20)

    if path is None:
        few_tokens = n_tok * 4 < vocab     # gathered rows << whole table
        path = "gather" if (matmul_limit > budget or few_tokens) else "matmul"

    if path == "matmul":
        vmem_limit = min(budget, max(matmul_limit, 16 << 20))
        out = _matmul_path(tok_flat, prepared, tile_t, vmem_limit)
    elif path == "gather":
        gather_limit = (4 * tile_r * emb_pad * itemsize) + (8 << 20)
        vmem_limit = min(budget, max(gather_limit, 16 << 20))
        out = _gather_path(tok_flat, prepared, tile_r, vmem_limit)
    else:
        raise ValueError(f"unknown path {path!r}")

    return out.reshape(tokens.shape + (emb,))


if __name__ == "__main__":
    key = jax.random.PRNGKey(0)
    k1, k2, k3, k4 = jax.random.split(key, 4)

    # --- Case 1: small vocab -> resident-table one-hot matmul path ----------
    vocab, emb, seq, batch = 32, 32, 8, 2
    weight = jax.random.normal(k1, (vocab, emb), dtype=jnp.float32)  # nn.Embedding ~ N(0,1)
    tokens = jax.random.randint(k2, (seq, batch), 0, vocab, dtype=jnp.int32)
    prep = prepare_token_embedding(weight)          # pad once, reuse across calls
    out = jax.block_until_ready(token_embedding(tokens, prep))
    ref = jnp.take(weight, tokens, axis=0) * math.sqrt(emb)
    assert out.shape == (seq, batch, emb)
    assert jnp.allclose(out, ref, atol=1e-5, rtol=1e-5), "matmul path mismatch"

    # --- Case 2: larger vocab / few tokens -> DMA row-gather path -----------
    vocab2, emb2, seq2, batch2 = 512, 96, 16, 4
    weight2 = jax.random.normal(k3, (vocab2, emb2), dtype=jnp.float32)
    tokens2 = jax.random.randint(k4, (seq2, batch2), 0, vocab2, dtype=jnp.int32)
    prep2 = prepare_token_embedding(weight2)
    out2 = jax.block_until_ready(token_embedding(tokens2, prep2, path="gather"))
    ref2 = jnp.take(weight2, tokens2, axis=0) * math.sqrt(emb2)
    assert out2.shape == (seq2, batch2, emb2)
    assert jnp.allclose(out2, ref2, atol=1e-5, rtol=1e-5), "gather path mismatch"

    print("KERNEL_OK")
</pallas_src>

<mosaic_0001>
module attributes {stable_mosaic.version = 11 : i64} {
  func.func @kernel(%arg0: i32, %arg1: memref<16x1xi32, #tpu.memory_space<vmem>>, %arg2: memref<32x128xf32, #tpu.memory_space<any>>, %arg3: memref<16x128xf32, #tpu.memory_space<vmem>>, %arg4: memref<32x128xf32, #tpu.memory_space<vmem>>) attributes {dimension_semantics = [#tpu.dimension_semantics<arbitrary>], iteration_bounds = array<i64: 1>, scalar_prefetch = 0 : i64, scratch_operands = 1 : i64, tpu.core_type = #tpu.core_type<tc>, window_params = [{transform_indices = @transform_0, window_bounds = array<i64: 16, 1>}, {}, {transform_indices = @transform_2, window_bounds = array<i64: 16, 128>}]} {
    %c0_i32 = arith.constant 0 : i32
    %0 = arith.cmpi eq, %arg0, %c0_i32 : i32
    %1 = arith.extui %0 : i1 to i32
    %c0_i32_0 = arith.constant 0 : i32
    %2 = arith.cmpi ne, %1, %c0_i32_0 : i32
    scf.if %2 {
      "tpu.region"() ({
        %14 = tpu.sem_alloc : memref<!tpu.dma_semaphore, #tpu.memory_space<semaphore_mem>>
        tpu.enqueue_dma source(%arg2 : memref<32x128xf32, #tpu.memory_space<any>>) target(%arg4 : memref<32x128xf32, #tpu.memory_space<vmem>>) target_semaphore(%14 : memref<!tpu.dma_semaphore, #tpu.memory_space<semaphore_mem>>)
        tpu.wait_dma2 semaphore(%14 : memref<!tpu.dma_semaphore, #tpu.memory_space<semaphore_mem>>) src(%arg2 : memref<32x128xf32, #tpu.memory_space<any>>) dst(%arg4 : memref<32x128xf32, #tpu.memory_space<vmem>>)
        tpu.yield
      }) : () -> ()
    } else {
    }
    %c0 = arith.constant 0 : index
    %c0_1 = arith.constant 0 : index
    %3 = vector.load %arg1[%c0, %c0_1] : memref<16x1xi32, #tpu.memory_space<vmem>>, vector<16x1xi32>
    %4 = tpu.iota {dimensions = array<i32: 1>} : vector<16x32xi32>
    %5 = vector.broadcast %3 : vector<16x1xi32> to vector<16x32xi32>
    %6 = arith.cmpi eq, %4, %5 : vector<16x32xi32>
    %7 = arith.extui %6 : vector<16x32xi1> to vector<16x32xi32>
    %8 = arith.sitofp %7 : vector<16x32xi32> to vector<16x32xf32>
    %c0_2 = arith.constant 0 : index
    %c0_3 = arith.constant 0 : index
    %9 = vector.load %arg4[%c0_2, %c0_3] : memref<32x128xf32, #tpu.memory_space<vmem>>, vector<32x128xf32>
    %cst = arith.constant dense<0.000000e+00> : vector<16x128xf32>
    %10 = tpu.matmul %8, %9, %cst {dimension_numbers = #tpu.dot_dimension_numbers<[1], [0], [0], [1], [0, 0, 1, 1], [], []>, precision = #tpu.contract_precision<fp32>} : vector<16x32xf32>, vector<32x128xf32>, vector<16x128xf32> -> vector<16x128xf32>
    %cst_4 = arith.constant 5.65685415 : f32
    %11 = vector.broadcast %cst_4 : f32 to vector<16x128xf32>
    %12 = arith.mulf %10, %11 : vector<16x128xf32>
    %c0_5 = arith.constant 0 : index
    %c0_6 = arith.constant 0 : index
    %13 = vector.load %arg3[%c0_5, %c0_6] : memref<16x128xf32, #tpu.memory_space<vmem>>, vector<16x128xf32>
    tpu.vector_store %arg3[%c0_5, %c0_6], %12 {strides = array<i32>} : memref<16x128xf32, #tpu.memory_space<vmem>>, vector<16x128xf32>,
    return
  }
  func.func @transform_0(%arg0: i32) -> (i32, i32) {
    %c0_i32 = arith.constant 0 : i32
    %c0_i32_0 = arith.constant 0 : i32
    return %arg0, %c0_i32 : i32, i32
  }
  func.func @transform_2(%arg0: i32) -> (i32, i32) {
    %c0_i32 = arith.constant 0 : i32
    %c0_i32_0 = arith.constant 0 : i32
    return %arg0, %c0_i32 : i32, i32
  }
}

</mosaic_0001>

<llo_original>
// kernel: tpu_custom_call.1
$region0: #{tpu_custom_call.1}
  #allocation0 [shape = 'u32[]', space=smem, size = 0x4, offset = 0x4, fixed_abs, tag = 'smem constant byte address 0x4 - core index']
  #allocation1 [shape = 'u32[72,128]{1,0:T(1,128)}', space=vmem, size = 0x9000, scoped, tag = 'internal scratch']
  #allocation2 [shape = 'f32[32,128]{1,0:T(8,128)}', space=vmem, size = 0x4000, scoped, tag = 'scratch operand']
  #allocation6 [shape = 's32[]', space=sflag, size = 0x4, offset = 0, fixed_abs, tag = 'sflag constant byte address 0x0 - dummy sync flag']
  #allocation7 [shape = 's32[]', space=sflag, size = 0x4, offset = 0, fixed_abs, tag = 'sflag constant byte address 0x0 - dummy sync flag']
  #allocation8 [shape = 'u32[]', space=smem, size = 0x4, offset = 0x44, fixed_abs, tag = 'smem constant byte address 0x44 - assertion arg 0']
  #allocation9 [shape = 'u32[]', space=smem, size = 0x4, offset = 0x48, fixed_abs, tag = 'smem constant byte address 0x48 - assertion arg 1']
  %s0 = inlined_call_operand.vmem [shape: s32[16,1], index: 0, kind: input, shape index: {}]
  %s1 = inlined_call_operand.hbm [shape: f32[32,128], index: 1, kind: input, shape index: {}]
  %s2 = inlined_call_operand.hbm [shape: f32[16,128], index: 2, kind: output, shape index: {}]
  %s3 = sld [smem:[#allocation0]]
  $region23: #{tpu_custom_call.1} parent=0
    _
  %s5 = ssub.s32 1, %s3
  %s6 = scalar_select 0, %s5, %s3
  $region1: #{tpu_custom_call.1} parent=0
    #allocation3 [shape = 'u8[8192]{0}', space=vmem, size = 0x2000, scoped, tag = 'output window, operand 0, single buffered']
    #allocation4 [shape = 's32[1]{0}', space=sflag, size = 0x4, scoped, tag = 'scoped memory for tpu_custom_call.1']
    %7 = vsyncpa [#allocation4], 0
    // Predicated region
    $region2: #{tpu_custom_call.1} parent=1 // pred_check
      _
    $region3: #{tpu_custom_call.1} parent=1 // pred_check_branch
      %9 = sbr.rel (0) target = $region5
    $region4: #{tpu_custom_call.1} parent=1 // pred_region
      _
    $region5: #{tpu_custom_call.1} parent=1 // pred_fallthru
      _
    %p10 = scmp.eq.s32.totalorder 0, 0
    // Predicated region
    $region6: #{tpu_custom_call.1} parent=1 // pred_check
      %p11 = pneg %p10
    $region7: #{tpu_custom_call.1} parent=1 // pred_check_branch
      %13 = sbr.rel (%p11) target = $region9
    $region8: #{tpu_custom_call.1} parent=1 // pred_region
      $region10: #{tpu_custom_call.1} parent=8
        #allocation5 [shape = 's32[1]{0}', space=sflag, size = 0x4, scoped, tag = 'scoped memory for tpu_custom_call.1']
        // Predicated region
        $region11: #{tpu_custom_call.1} parent=10 // pred_check
          _
        $region12: #{tpu_custom_call.1} parent=10 // pred_check_branch
          %15 = sbr.rel target = $region14
        $region13: #{tpu_custom_call.1} parent=10 // pred_region
          %16 = sst [smem:[#allocation8]] [#allocation7]
          %17 = sst [smem:[#allocation9]] [#allocation6]
        $region14: #{tpu_custom_call.1} parent=10 // pred_fallthru
          _
        %19 = shalt.err (0)
        %s21 = sshll.u32 %s1, 4
        %s22 = int_to_ptr.hbm [resolvable:$true] %s21
        %s23 = sshll.u32 [#allocation2], 4
        %s24 = int_to_ptr.vmem [resolvable:$true] %s23
        %26 = dma.hbm_to_vmem [thread:$0]  %s22, 512, %s24, [#allocation5]
        %s27 = smul.u32 32, 1
        %s28 = sshll.u32 %s27, 4
        %29 = dma.done [#allocation5], %s28
    $region9: #{tpu_custom_call.1} parent=1 // pred_fallthru
      _
    %v30 = vld [vmem:[%s0] sm:$0xff]
    %v31 = vld [vmem:[%s0 + $0x8] sm:$0xff]
    %v32 = vlaneseq
    %v33 = vand.u32 %v32, 127
    %34 = vset.pattern.permute.xlu0 0
    %35 = vperm.xlu0 %34, %v30
    %v36 = vpop.permute.xlu0 %35
    %37 = vset.pattern.permute.xlu0 0
    %38 = vperm.xlu0 %37, %v31
    %v39 = vpop.permute.xlu0 %38
    %vm40 = vcmp.eq.s32.totalorder %v33, %v36
    %vm41 = vcmp.eq.s32.totalorder %v33, %v39
    %v42 = vsel %vm40, 1, 0
    %v43 = vsel %vm41, 1, 0
    %v44 = vcvt.s32.f32 %v42
    %v45 = vcvt.s32.f32 %v43
    %v46 = vld [vmem:[#allocation2] sm:$0xff]
    %v47 = vld [vmem:[#allocation2 + $0x8] sm:$0xff]
    %v48 = vld [vmem:[#allocation2 + $0x10] sm:$0xff]
    %v49 = vld [vmem:[#allocation2 + $0x18] sm:$0xff]
    %vm50 = vcmask 261120
    %v52 = vsel %vm50, %v44, 0
    %v55 = vsel %vm50, %v45, 0
    %57 = vmatpush.msra.mxu0 0.0
    %58 = vmatpush.msra.mxu0 0.0
    %59 = vmatpush.msra.mxu0 0.0
    %60 = vmatpush.msra.mxu0 0.0
    %61 = vmatpush.msra.mxu0 0.0
    %62 = vmatpush.msra.mxu0 0.0
    %63 = vmatpush.msra.mxu0 0.0
    %64 = vmatpush.msra.mxu0 0.0
    %65 = vmatpush.msra.mxu0 0.0
    %66 = vmatpush.msra.mxu0 0.0
    %67 = vmatpush.msra.mxu0 0.0
    %68 = vmatpush.msra.mxu0 0.0
    %v69 = vand.u32 %v49, 4294901760
    %70 = vmatpush.msra.mxu0 %v69
    %v71 = vand.u32 %v48, 4294901760
    %72 = vmatpush.msra.mxu0 %v71
    %v73 = vand.u32 %v47, 4294901760
    %74 = vmatpush.msra.mxu0 %v73
    %v75 = vand.u32 %v46, 4294901760
    %76 = vmatpush.msra.mxu0 %v75
    %v77 = vand.u32 %v52, 4294901760
    %v78 = vsub.f32 %v52, %v77
    %v79 = vand.u32 %v78, 4294901760
    %v80 = vsub.f32 %v78, %v79
    %v81 = vand.u32 %v80, 4294901760
    %82 = vmatmul.f32.gmra.mxu0 %v81
    %v83 = vpop.f32.mrf.mxu0
    %v84 = vadd.f32 0.0, %v83
    %v85 = vand.u32 %v55, 4294901760
    %v86 = vsub.f32 %v55, %v85
    %v87 = vand.u32 %v86, 4294901760
    %v88 = vsub.f32 %v86, %v87
    %v89 = vand.u32 %v88, 4294901760
    %90 = vmatmul.f32.gmra.mxu0 %v89
    %v91 = vpop.f32.mrf.mxu0
    %v92 = vadd.f32 0.0, %v91
    %93 = vdwg.mxu0
    %94 = vmatpush.msra.mxu0 0.0
    %95 = vmatpush.msra.mxu0 0.0
    %96 = vmatpush.msra.mxu0 0.0
    %97 = vmatpush.msra.mxu0 0.0
    %98 = vmatpush.msra.mxu0 0.0
    %99 = vmatpush.msra.mxu0 0.0
    %100 = vmatpush.msra.mxu0 0.0
    %101 = vmatpush.msra.mxu0 0.0
    %102 = vmatpush.msra.mxu0 0.0
    %103 = vmatpush.msra.mxu0 0.0
    %104 = vmatpush.msra.mxu0 0.0
    %105 = vmatpush.msra.mxu0 0.0
    %v106 = vand.u32 %v49, 4294901760
    %v107 = vsub.f32 %v49, %v106
    %v108 = vand.u32 %v107, 4294901760
    %v109 = vsub.f32 %v107, %v108
    %v110 = vand.u32 %v109, 4294901760
    %111 = vmatpush.msra.mxu0 %v110
    %v112 = vand.u32 %v48, 4294901760
    %v113 = vsub.f32 %v48, %v112
    %v114 = vand.u32 %v113, 4294901760
    %v115 = vsub.f32 %v113, %v114
    %v116 = vand.u32 %v115, 4294901760
    %117 = vmatpush.msra.mxu0 %v116
    %v118 = vand.u32 %v47, 4294901760
    %v119 = vsub.f32 %v47, %v118
    %v120 = vand.u32 %v119, 4294901760
    %v121 = vsub.f32 %v119, %v120
    %v122 = vand.u32 %v121, 4294901760
    %123 = vmatpush.msra.mxu0 %v122
    %v124 = vand.u32 %v46, 4294901760
    %v125 = vsub.f32 %v46, %v124
    %v126 = vand.u32 %v125, 4294901760
    %v127 = vsub.f32 %v125, %v126
    %v128 = vand.u32 %v127, 4294901760
    %129 = vmatpush.msra.mxu0 %v128
    %v130 = vand.u32 %v52, 4294901760
    %131 = vmatmul.f32.gmra.mxu0 %v130
    %v132 = vpop.f32.mrf.mxu0
    %v133 = vadd.f32 %v84, %v132
    %v134 = vand.u32 %v55, 4294901760
    %135 = vmatmul.f32.gmra.mxu0 %v134
    %v136 = vpop.f32.mrf.mxu0
    %v137 = vadd.f32 %v92, %v136
    %138 = vdwg.mxu0
    %139 = vmatpush.msra.mxu0 0.0
    %140 = vmatpush.msra.mxu0 0.0
    %141 = vmatpush.msra.mxu0 0.0
    %142 = vmatpush.msra.mxu0 0.0
    %143 = vmatpush.msra.mxu0 0.0
    %144 = vmatpush.msra.mxu0 0.0
    %145 = vmatpush.msra.mxu0 0.0
    %146 = vmatpush.msra.mxu0 0.0
    %147 = vmatpush.msra.mxu0 0.0
    %148 = vmatpush.msra.mxu0 0.0
    %149 = vmatpush.msra.mxu0 0.0
    %150 = vmatpush.msra.mxu0 0.0
    %v151 = vand.u32 %v49, 4294901760
    %v152 = vsub.f32 %v49, %v151
    %153 = vmatpush.msra.mxu0 %v152
    %v154 = vand.u32 %v48, 4294901760
    %v155 = vsub.f32 %v48, %v154
    %156 = vmatpush.msra.mxu0 %v155
    %v157 = vand.u32 %v47, 4294901760
    %v158 = vsub.f32 %v47, %v157
    %159 = vmatpush.msra.mxu0 %v158
    %v160 = vand.u32 %v46, 4294901760
    %v161 = vsub.f32 %v46, %v160
    %162 = vmatpush.msra.mxu0 %v161
    %v163 = vand.u32 %v52, 4294901760
    %v164 = vsub.f32 %v52, %v163
    %165 = vmatmul.f32.gmra.mxu0 %v164
    %v166 = vpop.f32.mrf.mxu0
    %v167 = vadd.f32 %v133, %v166
    %v168 = vand.u32 %v55, 4294901760
    %v169 = vsub.f32 %v55, %v168
    %170 = vmatmul.f32.gmra.mxu0 %v169
    %v171 = vpop.f32.mrf.mxu0
    %v172 = vadd.f32 %v137, %v171
    %173 = vdwg.mxu0
    %174 = vmatpush.msra.mxu0 0.0
    %175 = vmatpush.msra.mxu0 0.0
    %176 = vmatpush.msra.mxu0 0.0
    %177 = vmatpush.msra.mxu0 0.0
    %178 = vmatpush.msra.mxu0 0.0
    %179 = vmatpush.msra.mxu0 0.0
    %180 = vmatpush.msra.mxu0 0.0
    %181 = vmatpush.msra.mxu0 0.0
    %182 = vmatpush.msra.mxu0 0.0
    %183 = vmatpush.msra.mxu0 0.0
    %184 = vmatpush.msra.mxu0 0.0
    %185 = vmatpush.msra.mxu0 0.0
    %v186 = vand.u32 %v49, 4294901760
    %187 = vmatpush.msra.mxu0 %v186
    %v188 = vand.u32 %v48, 4294901760
    %189 = vmatpush.msra.mxu0 %v188
    %v190 = vand.u32 %v47, 4294901760
    %191 = vmatpush.msra.mxu0 %v190
    %v192 = vand.u32 %v46, 4294901760
    %193 = vmatpush.msra.mxu0 %v192
    %v194 = vand.u32 %v52, 4294901760
    %v195 = vsub.f32 %v52, %v194
    %v196 = vand.u32 %v195, 4294901760
    %197 = vmatmul.f32.gmra.mxu0 %v196
    %v198 = vpop.f32.mrf.mxu0
    %v199 = vadd.f32 %v167, %v198
    %v200 = vand.u32 %v55, 4294901760
    %v201 = vsub.f32 %v55, %v200
    %v202 = vand.u32 %v201, 4294901760
    %203 = vmatmul.f32.gmra.mxu0 %v202
    %v204 = vpop.f32.mrf.mxu0
    %v205 = vadd.f32 %v172, %v204
    %206 = vdwg.mxu0
    %207 = vmatpush.msra.mxu0 0.0
    %208 = vmatpush.msra.mxu0 0.0
    %209 = vmatpush.msra.mxu0 0.0
    %210 = vmatpush.msra.mxu0 0.0
    %211 = vmatpush.msra.mxu0 0.0
    %212 = vmatpush.msra.mxu0 0.0
    %213 = vmatpush.msra.mxu0 0.0
    %214 = vmatpush.msra.mxu0 0.0
    %215 = vmatpush.msra.mxu0 0.0
    %216 = vmatpush.msra.mxu0 0.0
    %217 = vmatpush.msra.mxu0 0.0
    %218 = vmatpush.msra.mxu0 0.0
    %v219 = vand.u32 %v49, 4294901760
    %v220 = vsub.f32 %v49, %v219
    %v221 = vand.u32 %v220, 4294901760
    %222 = vmatpush.msra.mxu0 %v221
    %v223 = vand.u32 %v48, 4294901760
    %v224 = vsub.f32 %v48, %v223
    %v225 = vand.u32 %v224, 4294901760
    %226 = vmatpush.msra.mxu0 %v225
    %v227 = vand.u32 %v47, 4294901760
    %v228 = vsub.f32 %v47, %v227
    %v229 = vand.u32 %v228, 4294901760
    %230 = vmatpush.msra.mxu0 %v229
    %v231 = vand.u32 %v46, 4294901760
    %v232 = vsub.f32 %v46, %v231
    %v233 = vand.u32 %v232, 4294901760
    %234 = vmatpush.msra.mxu0 %v233
    %v235 = vand.u32 %v52, 4294901760
    %236 = vmatmul.f32.gmra.mxu0 %v235
    %v237 = vpop.f32.mrf.mxu0
    %v238 = vadd.f32 %v199, %v237
    %v239 = vand.u32 %v55, 4294901760
    %240 = vmatmul.f32.gmra.mxu0 %v239
    %v241 = vpop.f32.mrf.mxu0
    %v242 = vadd.f32 %v205, %v241
    %243 = vdwg.mxu0
    %244 = vmatpush.msra.mxu0 0.0
    %245 = vmatpush.msra.mxu0 0.0
    %246 = vmatpush.msra.mxu0 0.0
    %247 = vmatpush.msra.mxu0 0.0
    %248 = vmatpush.msra.mxu0 0.0
    %249 = vmatpush.msra.mxu0 0.0
    %250 = vmatpush.msra.mxu0 0.0
    %251 = vmatpush.msra.mxu0 0.0
    %252 = vmatpush.msra.mxu0 0.0
    %253 = vmatpush.msra.mxu0 0.0
    %254 = vmatpush.msra.mxu0 0.0
    %255 = vmatpush.msra.mxu0 0.0
    %v256 = vand.u32 %v49, 4294901760
    %257 = vmatpush.msra.mxu0 %v256
    %v258 = vand.u32 %v48, 4294901760
    %259 = vmatpush.msra.mxu0 %v258
    %v260 = vand.u32 %v47, 4294901760
    %261 = vmatpush.msra.mxu0 %v260
    %v262 = vand.u32 %v46, 4294901760
    %263 = vmatpush.msra.mxu0 %v262
    %v264 = vand.u32 %v52, 4294901760
    %265 = vmatmul.f32.gmra.mxu0 %v264
    %v266 = vpop.f32.mrf.mxu0
    %v267 = vadd.f32 %v238, %v266
    %v268 = vand.u32 %v55, 4294901760
    %269 = vmatmul.f32.gmra.mxu0 %v268
    %v270 = vpop.f32.mrf.mxu0
    %v271 = vadd.f32 %v242, %v270
    %272 = vdwg.mxu0
    %v273 = vmul.f32 %v267, 5.656854
    %v274 = vmul.f32 %v271, 5.656854
    %275 = vst [vmem:[#allocation3] sm:$0xff] %v273
    %276 = vst [vmem:[#allocation3 + $0x8] sm:$0xff] %v274
    // Predicated region
    $region15: #{tpu_custom_call.1} parent=1 // pred_check
      _
    $region16: #{tpu_custom_call.1} parent=1 // pred_check_branch
      %278 = sbr.rel (0) target = $region18
    $region17: #{tpu_custom_call.1} parent=1 // pred_region
      %280 = vsyncadd [#allocation4], 0
      %s281 = sshll.u32 [#allocation3], 4
      %s282 = int_to_ptr.vmem [resolvable:$true] %s281
      %s283 = sshll.u32 %s2, 4
      %s284 = int_to_ptr.hbm [resolvable:$true] %s283
      %289 = dma.vmem_to_hbm [thread:$0]  %s282, 256, %s284, [#allocation4], 128, 128, 8
    $region18: #{tpu_custom_call.1} parent=1 // pred_fallthru
      _
    // Predicated region
    $region19: #{tpu_custom_call.1} parent=1 // pred_check
      _
    $region20: #{tpu_custom_call.1} parent=1 // pred_check_branch
      %291 = sbr.rel (0) target = $region22
    $region21: #{tpu_custom_call.1} parent=1 // pred_region
      %293 = dma.done [#allocation4], 256
    $region22: #{tpu_custom_call.1} parent=1 // pred_fallthru
      _
    %294 = vsyncpa [#allocation4], 1

</llo_original>
